<compile_context>
chip_gen: v7x
topology: tpu7x:2x2x1
jax: 0.10.0
libtpu: 0.0.40
codegen_flags: <defaults>
</compile_context>

<pallas_src>
from functools import partial

import numpy as np

import jax
import jax.numpy as jnp
from jax.experimental import pallas as pl
from jax.experimental.pallas import tpu as pltpu


def _round_up(v, m):
    return ((v + m - 1) // m) * m


# ----------------------------- kernels ---------------------------------------


def _lin_kernel(x_ref, wt_ref, o_ref):
    # x_ref: (tile, Cin_p)  wt_ref: (Cin_p, Cout_p)  o_ref: (tile, Cout_p)
    o_ref[...] = jnp.dot(
        x_ref[...], wt_ref[...], preferred_element_type=jnp.float32
    ).astype(o_ref.dtype)


def _propagate_kernel(
    col_ref, cnt_ref, a_ref, xw_ref, b_ref, o_ref, acc_ref,
    *, tile, max_cols, resident_xw,
):
    # col_ref: SMEM (num_blk*max_cols,) int32 compacted column-block indices
    # cnt_ref: SMEM (num_blk,) int32 number of non-empty column blocks per row block
    # a_ref  : (tile, tile) adjacency block       xw_ref: resident (Np, Cout_p) or
    #                                                     streamed (tile, Cout_p)
    # b_ref  : (1, Cout_p) f32 bias               o_ref : (tile, Cout_p) output block
    # acc_ref: VMEM (tile, Cout_p) f32 accumulator (resident across the s axis)
    i = pl.program_id(0)
    s = pl.program_id(1)
    ns = pl.num_programs(1)

    @pl.when(s == 0)
    def _():
        acc_ref[...] = jnp.zeros_like(acc_ref)

    # Only the first count[i] slots carry real (non-zero) adjacency blocks; padded
    # slots repeat the previous block index so their DMA is suppressed and the MXU
    # work is skipped here.
    @pl.when(s < cnt_ref[i])
    def _():
        if resident_xw:
            c = col_ref[i * max_cols + s]
            start = pl.multiple_of(c * tile, 128)
            xw_blk = xw_ref[pl.ds(start, tile), :]
        else:
            xw_blk = xw_ref[...]
        acc_ref[...] += jnp.dot(
            a_ref[...], xw_blk, preferred_element_type=jnp.float32
        )

    @pl.when(s == ns - 1)
    def _():
        o_ref[...] = (acc_ref[...] + b_ref[...]).astype(o_ref.dtype)


# ----------------------------- graph-side glue --------------------------------


def prepare_gcn_operands(
    edge_index, edge_weight, num_nodes, *, tile_n=512, compute_dtype=jnp.bfloat16
):
    """Build the dense padded adjacency + block-sparsity metadata for a graph.

    Pure glue (not kernel work): build it ONCE per graph and reuse it across layers.
    Must run outside jit (the block-sparsity tables are built host-side so the grid
    extents are static).
    """
    N = int(num_nodes)
    n128 = _round_up(max(N, 1), 128)                    # lane-dense minimum
    tile = min(_round_up(int(tile_n), 128), n128)       # multiple of 128
    if n128 >= 256:
        # Keep at least two row blocks (both v7x TensorCores get work; also caps
        # zero-padding). Inert on v5e/v6e.
        tile = min(tile, _round_up((n128 + 1) // 2, 128))
    Np = _round_up(N, tile)
    num_blk = Np // tile

    src, dst = edge_index[0], edge_index[1]
    # Scatter duplicate edges in f32 (matches scatter_add semantics), then cast so
    # the A stream is MXU-native. Padded rows/cols are real zeros.
    a = (
        jnp.zeros((Np, Np), jnp.float32)
        .at[dst, src]
        .add(edge_weight.astype(jnp.float32))
    ).astype(compute_dtype)

    # Host-side compacted per-row-block column-index table (drives DMA skipping).
    src_np = np.asarray(jax.device_get(src)).astype(np.int64)
    dst_np = np.asarray(jax.device_get(dst)).astype(np.int64)
    if src_np.size:
        pairs = np.unique(
            np.stack([dst_np // tile, src_np // tile], axis=1), axis=0
        )
    else:
        pairs = np.zeros((0, 2), np.int64)
    col_lists = [[] for _ in range(num_blk)]
    for r, c in pairs:
        col_lists[int(r)].append(int(c))
    counts = np.array([len(l) for l in col_lists], dtype=np.int32)
    max_cols = max(1, int(counts.max()) if counts.size else 1)
    col_idx = np.zeros((num_blk, max_cols), dtype=np.int32)
    for r, lst in enumerate(col_lists):
        if lst:
            col_idx[r, : len(lst)] = np.asarray(lst, dtype=np.int32)
            col_idx[r, len(lst):] = lst[-1]   # repeat last -> redundant DMA suppressed

    return {
        "a": a,
        "tile": tile,
        "Np": Np,
        "num_blk": num_blk,
        "max_cols": max_cols,
        # 1-D int32 tables (SMEM-friendly padding: 1D, long axis only).
        "col_idx": jnp.asarray(col_idx.reshape(-1)),
        "counts": jnp.asarray(counts),
        "nnz_blocks": int(pairs.shape[0]),
        "compute_dtype": compute_dtype,
    }


# ----------------------------- forward wrapper ---------------------------------


def gcn_conv_rnd_forward(
    x,
    edge_tuple,
    weight,            # PyTorch Linear convention: (C_out, C_in)
    bias=None,         # (C_out,) or None
    *,
    idx_keep=None,     # scheme_a pruning: host-side random edge subset (torch.randperm)
    prepared=None,     # output of prepare_gcn_operands (built from the PRUNED edges)
    tile_n=512,        # node tile; rounded to a multiple of 128
    compute_dtype=jnp.bfloat16,          # streaming dtype for A / X / W (f32 accumulation)
    xw_resident_bytes=16 * 1024 * 1024,  # budget gate for holding XW resident in VMEM
):
    edge_index, edge_weight = edge_tuple
    if idx_keep is not None:  # scheme_a in {'pruneall','pruneinc','keep'}
        edge_index = edge_index[:, idx_keep]
        edge_weight = edge_weight[idx_keep]

    N, C_in = x.shape
    C_out = weight.shape[0]

    if prepared is None:
        prepared = prepare_gcn_operands(
            edge_index, edge_weight, N, tile_n=tile_n, compute_dtype=compute_dtype
        )
    a = prepared["a"]
    tile = prepared["tile"]
    Np = prepared["Np"]
    num_blk = prepared["num_blk"]
    max_cols = prepared["max_cols"]
    col_idx = prepared["col_idx"]
    counts = prepared["counts"]
    nnz_blocks = prepared["nnz_blocks"]
    compute_dtype = prepared["compute_dtype"]

    Cin_p = _round_up(C_in, 128)
    Cout_p = _round_up(C_out, 128)
    cdt_bytes = jnp.dtype(compute_dtype).itemsize
    out_dtype = x.dtype
    out_bytes = jnp.dtype(out_dtype).itemsize

    # ---- per-layer operand prep (padding only) ---------------------------------
    xp = (
        jnp.zeros((Np, Cin_p), compute_dtype)
        .at[:N, :C_in]
        .set(x.astype(compute_dtype))
    )
    wt = (
        jnp.zeros((Cin_p, Cout_p), compute_dtype)
        .at[:C_in, :C_out]
        .set(weight.T.astype(compute_dtype))
    )
    b = jnp.zeros((1, Cout_p), jnp.float32)
    if bias is not None:
        b = b.at[0, :C_out].set(bias.astype(jnp.float32))

    # ---- 1) lin: XW = X @ W.T  (scheme_w == 'keep') ----------------------------
    lin_vmem = (
        2 * tile * Cin_p * cdt_bytes
        + 2 * Cin_p * Cout_p * cdt_bytes
        + 2 * tile * Cout_p * cdt_bytes
    )
    xw = pl.pallas_call(
        _lin_kernel,
        out_shape=jax.ShapeDtypeStruct((Np, Cout_p), compute_dtype),
        grid_spec=pltpu.PrefetchScalarGridSpec(
            num_scalar_prefetch=0,
            grid=(num_blk,),
            in_specs=[
                pl.BlockSpec((tile, Cin_p), lambda i: (i, 0)),
                pl.BlockSpec((Cin_p, Cout_p), lambda i: (0, 0)),
            ],
            out_specs=pl.BlockSpec((tile, Cout_p), lambda i: (i, 0)),
        ),
        compiler_params=pltpu.CompilerParams(
            dimension_semantics=("parallel",),
            vmem_limit_bytes=int(lin_vmem * 1.5) + (8 << 20),
        ),
    )(xp, wt)

    # ---- 2) propagate: out = A @ XW + bias -------------------------------------
    # Hold XW fully resident in VMEM (fetched once) when it fits the budget;
    # otherwise stream the needed column block (DMA suppressed for repeated indices).
    resident_xw = (2 * Np * Cout_p * cdt_bytes) <= int(xw_resident_bytes)
    if resident_xw:
        xw_spec = pl.BlockSpec((Np, Cout_p), lambda i, s, cols, cnt: (0, 0))
        xw_vmem = 2 * Np * Cout_p * cdt_bytes
        xw_traffic = Np * Cout_p * cdt_bytes
    else:
        xw_spec = pl.BlockSpec(
            (tile, Cout_p),
            lambda i, s, cols, cnt: (cols[i * max_cols + s], 0),
        )
        xw_vmem = 2 * tile * Cout_p * cdt_bytes
        xw_traffic = nnz_blocks * tile * Cout_p * cdt_bytes

    prop_vmem = (
        2 * tile * tile * cdt_bytes       # A double buffer
        + xw_vmem                         # XW (resident or streamed)
        + 2 * tile * Cout_p * out_bytes   # output double buffer
        + tile * Cout_p * 4               # f32 accumulator scratch
        + 2 * Cout_p * 4                  # bias
    )
    cost = pl.CostEstimate(
        flops=2 * nnz_blocks * tile * tile * Cout_p + Np * Cout_p,
        transcendentals=0,
        bytes_accessed=(
            nnz_blocks * tile * tile * cdt_bytes   # only non-zero A blocks are DMA'd
            + xw_traffic
            + Np * Cout_p * out_bytes
            + Cout_p * 4
        ),
    )

    kernel = partial(
        _propagate_kernel, tile=tile, max_cols=max_cols, resident_xw=resident_xw
    )
    out_p = pl.pallas_call(
        kernel,
        out_shape=jax.ShapeDtypeStruct((Np, Cout_p), out_dtype),
        grid_spec=pltpu.PrefetchScalarGridSpec(
            num_scalar_prefetch=2,     # (col_idx, counts) -> SMEM, drive the index_maps
            grid=(num_blk, max_cols),  # (dst row blocks, compacted src col blocks)
            in_specs=[
                pl.BlockSpec(
                    (tile, tile),
                    lambda i, s, cols, cnt: (i, cols[i * max_cols + s]),
                ),
                xw_spec,
                pl.BlockSpec((1, Cout_p), lambda i, s, cols, cnt: (0, 0)),
            ],
            out_specs=pl.BlockSpec((tile, Cout_p), lambda i, s, cols, cnt: (i, 0)),
            scratch_shapes=[pltpu.VMEM((tile, Cout_p), jnp.float32)],
        ),
        compiler_params=pltpu.CompilerParams(
            dimension_semantics=("parallel", "arbitrary"),
            vmem_limit_bytes=int(prop_vmem * 1.5) + (8 << 20),
        ),
        cost_estimate=cost,
    )(col_idx, counts, a, xw, b)

    out = out_p[:N, :C_out]
    return out, (edge_index, edge_weight)


# ----------------------------- reference --------------------------------------


def reference_forward(x, edge_tuple, weight, bias=None, *, idx_keep=None):
    edge_index, edge_weight = edge_tuple
    if idx_keep is not None:
        edge_index = edge_index[:, idx_keep]
        edge_weight = edge_weight[idx_keep]
    xw = jnp.dot(x, weight.T, precision=jax.lax.Precision.HIGHEST)
    src, dst = edge_index[0], edge_index[1]
    msg = edge_weight[:, None] * xw[src]
    out = jnp.zeros((x.shape[0], weight.shape[0]), jnp.float32).at[dst].add(msg)
    if bias is not None:
        out = out + bias
    return out, (edge_index, edge_weight)


# ----------------------------- test -------------------------------------------


if __name__ == "__main__":
    key = jax.random.PRNGKey(0)
    N, C_in, C_out, E = 520, 48, 32, 1500
    thr_a = 0.5

    keys = jax.random.split(key, 11)
    x = jax.random.normal(keys[0], (N, C_in), dtype=jnp.float32)

    # Structured edge set so the block-sparsity path is exercised:
    #   A: src,dst in [0,370)        -> upper-left blocks
    #   B: dst in [384,500), src<200 -> lower-left block(s)
    #   C: dst<200, src in [384,520) -> upper-right block(s)
    # Nodes >= 500 receive no edges (bias-only rows / empty row blocks).
    nA, nB, nC = 900, 375, 225
    srcA = jax.random.randint(keys[1], (nA,), 0, 370, dtype=jnp.int32)
    dstA = jax.random.randint(keys[2], (nA,), 0, 370, dtype=jnp.int32)
    srcB = jax.random.randint(keys[3], (nB,), 0, 200, dtype=jnp.int32)
    dstB = jax.random.randint(keys[4], (nB,), 384, 500, dtype=jnp.int32)
    srcC = jax.random.randint(keys[5], (nC,), 384, 520, dtype=jnp.int32)
    dstC = jax.random.randint(keys[6], (nC,), 0, 200, dtype=jnp.int32)
    src = jnp.concatenate([srcA, srcB, srcC])
    dst = jnp.concatenate([dstA, dstB, dstC])
    edge_index = jnp.stack([src, dst], axis=0)
    edge_weight = jax.random.uniform(keys[7], (E,), dtype=jnp.float32)

    limit = (6.0 / (C_in + C_out)) ** 0.5
    weight = jax.random.uniform(
        keys[8], (C_out, C_in), minval=-limit, maxval=limit, dtype=jnp.float32
    )
    bias = jax.random.uniform(keys[9], (C_out,), minval=-0.1, maxval=0.1, dtype=jnp.float32)

    # scheme_a == 'keep': random edge subset (torch.randperm analogue, host-side).
    amount = int(E * (1 - thr_a))
    idx_keep = jax.random.permutation(keys[10], E)[:amount]

    ref, _ = reference_forward(
        x, (edge_index, edge_weight), weight, bias, idx_keep=idx_keep
    )

    # Config 1: f32 stream, default tile (512 -> split into 2 row blocks), resident XW.
    out, (ei_out, ew_out) = gcn_conv_rnd_forward(
        x, (edge_index, edge_weight), weight, bias,
        idx_keep=idx_keep, compute_dtype=jnp.float32,
    )
    out = jax.block_until_ready(out)
    assert out.shape == (N, C_out)
    assert jnp.allclose(out, ref, atol=3e-3, rtol=3e-3), "mismatch vs ref (float32)"
    assert ei_out.shape == (2, amount) and ew_out.shape == (amount,)

    # Config 2: bf16 stream, tile 256 (3 row blocks, one of them empty), operands
    # precomputed once (reusable across layers), XW forced onto the streamed path.
    ei_pruned = edge_index[:, idx_keep]
    ew_pruned = edge_weight[idx_keep]
    prep = prepare_gcn_operands(
        ei_pruned, ew_pruned, N, tile_n=256, compute_dtype=jnp.bfloat16
    )
    out2, _ = gcn_conv_rnd_forward(
        x, (edge_index, edge_weight), weight, bias,
        idx_keep=idx_keep, prepared=prep, xw_resident_bytes=0,
    )
    out2 = jax.block_until_ready(out2)
    assert out2.shape == (N, C_out)
    assert jnp.allclose(out2, ref, atol=6e-2, rtol=6e-2), "mismatch vs ref (bfloat16)"

    print("KERNEL_OK")
</pallas_src>

<mosaic_0001>
module attributes {stable_mosaic.version = 11 : i64} {
  func.func @_lin_kernel(%arg0: i32, %arg1: memref<384x128xf32, #tpu.memory_space<vmem>>, %arg2: memref<128x128xf32, #tpu.memory_space<vmem>>, %arg3: memref<384x128xf32, #tpu.memory_space<vmem>>) attributes {dimension_semantics = [#tpu.dimension_semantics<parallel>], iteration_bounds = array<i64: 2>, scalar_prefetch = 0 : i64, scratch_operands = 0 : i64, tpu.core_type = #tpu.core_type<tc>, window_params = [{transform_indices = @transform_0, window_bounds = array<i64: 384, 128>}, {pipeline_mode = #tpu.pipeline_mode<synchronous>, transform_indices = @transform_1, window_bounds = array<i64: 128, 128>}, {transform_indices = @transform_2, window_bounds = array<i64: 384, 128>}]} {
    %c0 = arith.constant 0 : index
    %c0_0 = arith.constant 0 : index
    %0 = vector.load %arg1[%c0, %c0_0] : memref<384x128xf32, #tpu.memory_space<vmem>>, vector<384x128xf32>
    %c0_1 = arith.constant 0 : index
    %c0_2 = arith.constant 0 : index
    %1 = vector.load %arg2[%c0_1, %c0_2] : memref<128x128xf32, #tpu.memory_space<vmem>>, vector<128x128xf32>
    %cst = arith.constant dense<0.000000e+00> : vector<384x128xf32>
    %2 = tpu.matmul %0, %1, %cst {dimension_numbers = #tpu.dot_dimension_numbers<[1], [0], [0], [1], [0, 0, 1, 1], [], []>} : vector<384x128xf32>, vector<128x128xf32>, vector<384x128xf32> -> vector<384x128xf32>
    %c0_3 = arith.constant 0 : index
    %c0_4 = arith.constant 0 : index
    %3 = vector.load %arg3[%c0_3, %c0_4] : memref<384x128xf32, #tpu.memory_space<vmem>>, vector<384x128xf32>
    tpu.vector_store %arg3[%c0_3, %c0_4], %2 {strides = array<i32>} : memref<384x128xf32, #tpu.memory_space<vmem>>, vector<384x128xf32>,
    return
  }
  func.func @transform_0(%arg0: i32) -> (i32, i32) {
    %c0_i32 = arith.constant 0 : i32
    %c0_i32_0 = arith.constant 0 : i32
    return %arg0, %c0_i32 : i32, i32
  }
  func.func @transform_1(%arg0: i32) -> (i32, i32) {
    %c0_i32 = arith.constant 0 : i32
    %c0_i32_0 = arith.constant 0 : i32
    %c0_i32_1 = arith.constant 0 : i32
    return %c0_i32, %c0_i32_0 : i32, i32
  }
  func.func @transform_2(%arg0: i32) -> (i32, i32) {
    %c0_i32 = arith.constant 0 : i32
    %c0_i32_0 = arith.constant 0 : i32
    return %arg0, %c0_i32 : i32, i32
  }
}

</mosaic_0001>

<llo_original>
// kernel: tpu_custom_call.1
$region0: #{tpu_custom_call.1}
  #allocation0 [shape = 'u32[]', space=smem, size = 0x4, offset = 0x4, fixed_abs, tag = 'smem constant byte address 0x4 - core index']
  #allocation1 [shape = 'u32[144,128]{1,0:T(1,128)}', space=vmem, size = 0x12000, scoped, tag = 'internal scratch']
  %s0 = inlined_call_operand.hbm [shape: f32[768,128], index: 0, kind: input, shape index: {}]
  %s1 = inlined_call_operand.hbm [shape: f32[128,128], index: 1, kind: input, shape index: {}]
  %s2 = inlined_call_operand.hbm [shape: f32[768,128], index: 2, kind: output, shape index: {}]
  %s3 = sld [smem:[#allocation0]]
  $region49: #{tpu_custom_call.1} parent=0
    _
  %s5 = ssub.s32 1, %s3
  %s6 = scalar_select 0, %s5, %s3
  $region1: #{tpu_custom_call.1} parent=0
    #allocation2 [shape = 'u8[393216]{0}', space=vmem, size = 0x60000, scoped, tag = 'input window, operand 0']
    #allocation3 [shape = 's32[2]{0}', space=sflag, size = 0x8, scoped, tag = 'scoped memory for tpu_custom_call.1']
    #allocation4 [shape = 's32[2]{0}', space=sflag, size = 0x8, scoped, tag = 'scoped memory for tpu_custom_call.1']
    #allocation5 [shape = 'u8[65536]{0}', space=vmem, size = 0x10000, scoped, tag = 'input window, operand 1, single buffered']
    #allocation6 [shape = 's32[1]{0}', space=sflag, size = 0x4, scoped, tag = 'scoped memory for tpu_custom_call.1']
    #allocation7 [shape = 'u8[393216]{0}', space=vmem, size = 0x60000, scoped, tag = 'output window, operand 0']
    %7 = vsyncpa [#allocation3], 0
    %s8 = scalar_lea.sflag [#allocation3], 1
    %9 = vsyncpa %s8, 0
    %10 = vsyncpa [#allocation6], 0
    %11 = vsyncpa [#allocation4], 0
    %s12 = scalar_lea.sflag [#allocation4], 1
    %13 = vsyncpa %s12, 0
    loop: start=0, step=1, limit=4
    $region2: #{tpu_custom_call.1} parent=1 // loop_pre_header
      _
    $region3: #{tpu_custom_call.1} parent=1 // loop_header
      %s15 = sphi 0, %s19
      %p16 = scmp.ge.s32.totalorder %s15, 4
      %s25 = sphi 0, %s27
      %s28 = sphi 0, %s25
      %s29 = sphi 0, %s28
      %s45 = sphi 0, %s29
      %s49 = sphi 0, %s49
      %s51 = sphi 0, %s49
      %s52 = sphi 0, %s51
      %s66 = sphi 0, %s52
      %s72 = sphi 0, %s74
      %s75 = sphi 0, %s72
      %s76 = sphi 0, %s75
      %s92 = sphi 0, %s76
    $region4: #{tpu_custom_call.1} parent=1 // loop_header_branch
      %18 = sbr.rel (%p16) target = $region8
    $region5: #{tpu_custom_call.1} parent=1 // loop_body
      %s20 = ssub.s32 %s15, 1
      %s21 = ssub.s32 %s15, 2
      %s22 = sadd.s32 %s15, 1
      %s23 = ssub.s32 %s15, %s22
      %p24 = scmp.eq.s32.totalorder %s23, 0
      %s26 = sadd.s32 %s25, 1
      %s27 = scalar_select %p24, %s25, %s26
      %p30 = pneg %p24
      %p31 = scmp.eq.s32.totalorder %s15, 1
      %p32 = por %p30, %p31
      %p33 = scmp.ne.s32.totalorder %s25, %s28
      %p34 = scmp.eq.s32.totalorder %s15, 0
      %p35 = por %p33, %p34
      %p36 = scmp.ne.s32.totalorder %s25, %s28
      %p37 = scmp.eq.s32.totalorder %s20, 1
      %p38 = por %p36, %p37
      %p39 = scmp.ne.s32.totalorder %s28, %s29
      %p40 = scmp.eq.s32.totalorder %s20, 0
      %p41 = por %p39, %p40
      %p42 = scmp.ne.s32.totalorder %s28, %s29
      %p43 = scmp.eq.s32.totalorder %s21, 1
      %p44 = por %p42, %p43
      %p46 = scmp.ne.s32.totalorder %s29, %s45
      %p47 = scmp.eq.s32.totalorder %s21, 0
      %p48 = por %p46, %p47
      %s50 = sadd.s32 %s49, 1
      %p53 = scmp.eq.s32.totalorder %s15, 1
      %p54 = scmp.ne.s32.totalorder %s49, %s51
      %p55 = scmp.eq.s32.totalorder %s15, 0
      %p56 = por %p54, %p55
      %p57 = scmp.ne.s32.totalorder %s49, %s51
      %p58 = scmp.eq.s32.totalorder %s20, 1
      %p59 = por %p57, %p58
      %p60 = scmp.ne.s32.totalorder %s51, %s52
      %p61 = scmp.eq.s32.totalorder %s20, 0
      %p62 = por %p60, %p61
      %p63 = scmp.ne.s32.totalorder %s51, %s52
      %p64 = scmp.eq.s32.totalorder %s21, 1
      %p65 = por %p63, %p64
      %p67 = scmp.ne.s32.totalorder %s52, %s66
      %p68 = scmp.eq.s32.totalorder %s21, 0
      %p69 = por %p67, %p68
      %s70 = ssub.s32 %s15, %s22
      %p71 = scmp.eq.s32.totalorder %s70, 0
      %s73 = sadd.s32 %s72, 1
      %s74 = scalar_select %p71, %s72, %s73
      %p77 = pneg %p71
      %p78 = scmp.eq.s32.totalorder %s15, 1
      %p79 = por %p77, %p78
      %p80 = scmp.ne.s32.totalorder %s72, %s75
      %p81 = scmp.eq.s32.totalorder %s15, 0
      %p82 = por %p80, %p81
      %p83 = scmp.ne.s32.totalorder %s72, %s75
      %p84 = scmp.eq.s32.totalorder %s20, 1
      %p85 = por %p83, %p84
      %p86 = scmp.ne.s32.totalorder %s75, %s76
      %p87 = scmp.eq.s32.totalorder %s20, 0
      %p88 = por %p86, %p87
      %p89 = scmp.ne.s32.totalorder %s75, %s76
      %p90 = scmp.eq.s32.totalorder %s21, 1
      %p91 = por %p89, %p90
      %p93 = scmp.ne.s32.totalorder %s76, %s92
      %p94 = scmp.eq.s32.totalorder %s21, 0
      %p95 = por %p93, %p94
      %p96 = scmp.le.s32.totalorder 1, %s15
      %p97 = scmp.lt.s32.totalorder %s15, 3
      %p98 = pnand %p96, %p97
      %p99 = pneg %p98
      // Predicated region
      $region9: #{tpu_custom_call.1} parent=5 // pred_check
        _
      $region10: #{tpu_custom_call.1} parent=5 // pred_check_branch
        %101 = sbr.rel (%p98) target = $region12
      $region11: #{tpu_custom_call.1} parent=5 // pred_region
        %s102 = ssub.s32 %s15, 1
        // Predicated region
        $region13: #{tpu_custom_call.1} parent=11 // pred_check
          %p103 = pneg %p62
        $region14: #{tpu_custom_call.1} parent=11 // pred_check_branch
          %105 = sbr.rel (%p103) target = $region16
        $region15: #{tpu_custom_call.1} parent=11 // pred_region
          %s107 = ssub.s32 2048, 2048
          %108 = vsyncadd [#allocation6], %s107
          %s109 = sshll.u32 [#allocation5], 4
          %s110 = int_to_ptr.vmem [resolvable:$true] %s109
          %115 = dma.hbm_to_vmem [thread:$0]  %s1, 2048, %s110, [#allocation6], 128, 128, 8
        $region16: #{tpu_custom_call.1} parent=11 // pred_fallthru
          _
      $region12: #{tpu_custom_call.1} parent=5 // pred_fallthru
        _
      %p116 = scmp.lt.s32.totalorder %s15, 2
      // Predicated region
      $region17: #{tpu_custom_call.1} parent=5 // pred_check
        %p117 = pneg %p116
      $region18: #{tpu_custom_call.1} parent=5 // pred_check_branch
        %119 = sbr.rel (%p117) target = $region20
      $region19: #{tpu_custom_call.1} parent=5 // pred_region
        // Predicated region
        $region21: #{tpu_custom_call.1} parent=19 // pred_check
          %p120 = pneg %p35
        $region22: #{tpu_custom_call.1} parent=19 // pred_check_branch
          %122 = sbr.rel (%p120) target = $region24
        $region23: #{tpu_custom_call.1} parent=19 // pred_region
          %s123 = sand.u32 %s25, 1
          %s124 = scalar_lea.sflag [#allocation3], %s123
          %s125 = sand.u32 %s25, 1
          %s126 = smul.addr %s125, 384
          %s127 = scalar_lea.vmem [#allocation2], %s126
          %s128 = smul.u32 48, %s15
          %s130 = ssub.s32 6144, 6144
          %131 = vsyncadd %s124, %s130
          %s132 = smul.addr %s128, 128
          %s133 = scalar_lea.hbm %s0, %s132
          %s134 = sshll.u32 %s127, 4
          %s135 = int_to_ptr.vmem [resolvable:$true] %s134
          %140 = dma.hbm_to_vmem [thread:$0]  %s133, 6144, %s135, %s124, 128, 128, 8
        $region24: #{tpu_custom_call.1} parent=19 // pred_fallthru
          _
      $region20: #{tpu_custom_call.1} parent=5 // pred_fallthru
        _
      %p141 = scmp.le.s32.totalorder 1, %s15
      %p142 = scmp.lt.s32.totalorder %s15, 3
      %p143 = pnand %p141, %p142
      %p144 = pneg %p143
      // Predicated region
      $region25: #{tpu_custom_call.1} parent=5 // pred_check
        _
      $region26: #{tpu_custom_call.1} parent=5 // pred_check_branch
        %146 = sbr.rel (%p143) target = $region28
      $region27: #{tpu_custom_call.1} parent=5 // pred_region
        %s147 = ssub.s32 %s15, 1
        %s148 = sand.u32 %s28, 1
        %s149 = scalar_lea.sflag [#allocation3], %s148
        %s150 = sand.u32 %s28, 1
        %s151 = smul.addr %s150, 384
        %s152 = scalar_lea.vmem [#allocation2], %s151
        // Predicated region
        $region29: #{tpu_custom_call.1} parent=27 // pred_check
          %p153 = pneg %p41
        $region30: #{tpu_custom_call.1} parent=27 // pred_check_branch
          %155 = sbr.rel (%p153) target = $region32
        $region31: #{tpu_custom_call.1} parent=27 // pred_region
          %156 = dma.done %s149, 6144
        $region32: #{tpu_custom_call.1} parent=27 // pred_fallthru
          _
        // Predicated region
        $region33: #{tpu_custom_call.1} parent=27 // pred_check
          %p157 = pneg %p62
        $region34: #{tpu_custom_call.1} parent=27 // pred_check_branch
          %159 = sbr.rel (%p157) target = $region36
        $region35: #{tpu_custom_call.1} parent=27 // pred_region
          %160 = dma.done [#allocation6], 2048
        $region36: #{tpu_custom_call.1} parent=27 // pred_fallthru
          _
        %s161 = sand.u32 %s28, 1
        %s162 = scalar_lea.sflag [#allocation3], %s161
        %s163 = sand.u32 %s28, 1
        %s164 = smul.addr %s163, 384
        %s165 = scalar_lea.vmem [#allocation2], %s164
        %p166 = pneg %p41
        %p167 = pneg %p38
        %p168 = pneg %p62
        %p169 = pneg %p59
        %p170 = pneg %p88
        %p171 = pneg %p85
        %s172 = sand.u32 %s75, 1
        %s173 = scalar_lea.sflag [#allocation4], %s172
        %s174 = sand.u32 %s75, 1
        %s175 = smul.addr %s174, 384
        %s176 = scalar_lea.vmem [#allocation7], %s175
        %s177 = smul.u32 48, %s20
        %s178 = smul.u32 48, %s20
        %v179 = vld [vmem:[%s152] sm:$0xff]
        %v180 = vld [vmem:[%s152 + $0x8] sm:$0xff]
        %v181 = vld [vmem:[%s152 + $0x10] sm:$0xff]
        %v182 = vld [vmem:[%s152 + $0x18] sm:$0xff]
        %v183 = vld [vmem:[%s152 + $0x20] sm:$0xff]
        %v184 = vld [vmem:[%s152 + $0x28] sm:$0xff]
        %v185 = vld [vmem:[%s152 + $0x30] sm:$0xff]
        %v186 = vld [vmem:[%s152 + $0x38] sm:$0xff]
        %v187 = vld [vmem:[%s152 + $0x40] sm:$0xff]
        %v188 = vld [vmem:[%s152 + $0x48] sm:$0xff]
        %v189 = vld [vmem:[%s152 + $0x50] sm:$0xff]
        %v190 = vld [vmem:[%s152 + $0x58] sm:$0xff]
        %v191 = vld [vmem:[%s152 + $0x60] sm:$0xff]
        %v192 = vld [vmem:[%s152 + $0x68] sm:$0xff]
        %v193 = vld [vmem:[%s152 + $0x70] sm:$0xff]
        %v194 = vld [vmem:[%s152 + $0x78] sm:$0xff]
        %v195 = vld [vmem:[%s152 + $0x80] sm:$0xff]
        %v196 = vld [vmem:[%s152 + $0x88] sm:$0xff]
        %v197 = vld [vmem:[%s152 + $0x90] sm:$0xff]
        %v198 = vld [vmem:[%s152 + $0x98] sm:$0xff]
        %v199 = vld [vmem:[%s152 + $0xa0] sm:$0xff]
        %v200 = vld [vmem:[%s152 + $0xa8] sm:$0xff]
        %v201 = vld [vmem:[%s152 + $0xb0] sm:$0xff]
        %v202 = vld [vmem:[%s152 + $0xb8] sm:$0xff]
        %v203 = vld [vmem:[%s152 + $0xc0] sm:$0xff]
        %v204 = vld [vmem:[%s152 + $0xc8] sm:$0xff]
        %v205 = vld [vmem:[%s152 + $0xd0] sm:$0xff]
        %v206 = vld [vmem:[%s152 + $0xd8] sm:$0xff]
        %v207 = vld [vmem:[%s152 + $0xe0] sm:$0xff]
        %v208 = vld [vmem:[%s152 + $0xe8] sm:$0xff]
        %v209 = vld [vmem:[%s152 + $0xf0] sm:$0xff]
        %v210 = vld [vmem:[%s152 + $0xf8] sm:$0xff]
        %v211 = vld [vmem:[%s152 + $0x100] sm:$0xff]
        %v212 = vld [vmem:[%s152 + $0x108] sm:$0xff]
        %v213 = vld [vmem:[%s152 + $0x110] sm:$0xff]
        %v214 = vld [vmem:[%s152 + $0x118] sm:$0xff]
        %v215 = vld [vmem:[%s152 + $0x120] sm:$0xff]
        %v216 = vld [vmem:[%s152 + $0x128] sm:$0xff]
        %v217 = vld [vmem:[%s152 + $0x130] sm:$0xff]
        %v218 = vld [vmem:[%s152 + $0x138] sm:$0xff]
        %v219 = vld [vmem:[%s152 + $0x140] sm:$0xff]
        %v220 = vld [vmem:[%s152 + $0x148] sm:$0xff]
        %v221 = vld [vmem:[%s152 + $0x150] sm:$0xff]
        %v222 = vld [vmem:[%s152 + $0x158] sm:$0xff]
        %v223 = vld [vmem:[%s152 + $0x160] sm:$0xff]
        %v224 = vld [vmem:[%s152 + $0x168] sm:$0xff]
        %v225 = vld [vmem:[%s152 + $0x170] sm:$0xff]
        %v226 = vld [vmem:[%s152 + $0x178] sm:$0xff]
        %v227 = vld [vmem:[#allocation5] sm:$0xff]
        %v228 = vld [vmem:[#allocation5 + $0x8] sm:$0xff]
        %v229 = vld [vmem:[#allocation5 + $0x10] sm:$0xff]
        %v230 = vld [vmem:[#allocation5 + $0x18] sm:$0xff]
        %v231 = vld [vmem:[#allocation5 + $0x20] sm:$0xff]
        %v232 = vld [vmem:[#allocation5 + $0x28] sm:$0xff]
        %v233 = vld [vmem:[#allocation5 + $0x30] sm:$0xff]
        %v234 = vld [vmem:[#allocation5 + $0x38] sm:$0xff]
        %v235 = vld [vmem:[#allocation5 + $0x40] sm:$0xff]
        %v236 = vld [vmem:[#allocation5 + $0x48] sm:$0xff]
        %v237 = vld [vmem:[#allocation5 + $0x50] sm:$0xff]
        %v238 = vld [vmem:[#allocation5 + $0x58] sm:$0xff]
        %v239 = vld [vmem:[#allocation5 + $0x60] sm:$0xff]
        %v240 = vld [vmem:[#allocation5 + $0x68] sm:$0xff]
        %v241 = vld [vmem:[#allocation5 + $0x70] sm:$0xff]
        %v242 = vld [vmem:[#allocation5 + $0x78] sm:$0xff]
        %243 = vmatprep.subr.mxu0 0.0
        %244 = vmatpush1.msra.mxu0 %v227
        %245 = vmatprep.subr.mxu0 0.0
        %246 = vmatpush1.msra.mxu0 %v228
        %247 = vmatprep.subr.mxu0 0.0
        %248 = vmatpush1.msra.mxu0 %v229
        %249 = vmatprep.subr.mxu0 0.0
        %250 = vmatpush1.msra.mxu0 %v230
        %251 = vmatprep.subr.mxu0 0.0
        %252 = vmatpush1.msra.mxu0 %v231
        %253 = vmatprep.subr.mxu0 0.0
        %254 = vmatpush1.msra.mxu0 %v232
        %255 = vmatprep.subr.mxu0 0.0
        %256 = vmatpush1.msra.mxu0 %v233
        %257 = vmatprep.subr.mxu0 0.0
        %258 = vmatpush1.msra.mxu0 %v234
        %259 = vmatprep.subr.mxu0 0.0
        %260 = vmatpush1.msra.mxu0 %v235
        %261 = vmatprep.subr.mxu0 0.0
        %262 = vmatpush1.msra.mxu0 %v236
        %263 = vmatprep.subr.mxu0 0.0
        %264 = vmatpush1.msra.mxu0 %v237
        %265 = vmatprep.subr.mxu0 0.0
        %266 = vmatpush1.msra.mxu0 %v238
        %267 = vmatprep.subr.mxu0 0.0
        %268 = vmatpush1.msra.mxu0 %v239
        %269 = vmatprep.subr.mxu0 0.0
        %270 = vmatpush1.msra.mxu0 %v240
        %271 = vmatprep.subr.mxu0 0.0
        %272 = vmatpush1.msra.mxu0 %v241
        %273 = vmatprep.subr.mxu0 0.0
        %274 = vmatpush1.msra.mxu0 %v242
        %275 = vmatprep.subr.mxu0 0.0
        %276 = vmatpush1.msra.mxu0 0.0
        %277 = vmatprep.subr.mxu0 0.0
        %278 = vmatpush1.msra.mxu0 0.0
        %279 = vmatprep.subr.mxu0 0.0
        %280 = vmatpush1.msra.mxu0 0.0
        %281 = vmatprep.subr.mxu0 0.0
        %282 = vmatpush1.msra.mxu0 0.0
        %283 = vmatprep.subr.mxu0 0.0
        %284 = vmatpush1.msra.mxu0 0.0
        %285 = vmatprep.subr.mxu0 0.0
        %286 = vmatpush1.msra.mxu0 0.0
        %287 = vmatprep.subr.mxu0 0.0
        %288 = vmatpush1.msra.mxu0 0.0
        %289 = vmatprep.subr.mxu0 0.0
        %290 = vmatpush1.msra.mxu0 0.0
        %291 = vmatprep.subr.mxu0 0.0
        %292 = vmatpush1.msra.mxu0 0.0
        %293 = vmatprep.subr.mxu0 0.0
        %294 = vmatpush1.msra.mxu0 0.0
        %295 = vmatprep.subr.mxu0 0.0
        %296 = vmatpush1.msra.mxu0 0.0
        %297 = vmatprep.subr.mxu0 0.0
        %298 = vmatpush1.msra.mxu0 0.0
        %299 = vmatprep.subr.mxu0 0.0
        %300 = vmatpush1.msra.mxu0 0.0
        %301 = vmatprep.subr.mxu0 0.0
        %302 = vmatpush1.msra.mxu0 0.0
        %303 = vmatprep.subr.mxu0 0.0
        %304 = vmatpush1.msra.mxu0 0.0
        %305 = vmatprep.subr.mxu0 0.0
        %306 = vmatpush1.msra.mxu0 0.0
        %307 = vmatprep.mubr.f32.mxu0 0.0
        %308 = vmatmul.mubr.f32.gmra.mrb[0].mxu0 %v179
        %v309 = vpop.f32.mrb[0].mxu0
        %v310 = vadd.f32 0.0, %v309
        %v311 = vpop.f32.mrb[0].mxu0
        %312 = vmatprep.mubr.f32.mxu0 0.0
        %313 = vmatmul.mubr.f32.gmra.mrb[0].mxu0 %v180
        %v314 = vpop.f32.mrb[0].mxu0
        %v315 = vadd.f32 0.0, %v314
        %v316 = vpop.f32.mrb[0].mxu0
        %317 = vmatprep.mubr.f32.mxu0 0.0
        %318 = vmatmul.mubr.f32.gmra.mrb[0].mxu0 %v181
        %v319 = vpop.f32.mrb[0].mxu0
        %v320 = vadd.f32 0.0, %v319
        %v321 = vpop.f32.mrb[0].mxu0
        %322 = vmatprep.mubr.f32.mxu0 0.0
        %323 = vmatmul.mubr.f32.gmra.mrb[0].mxu0 %v182
        %v324 = vpop.f32.mrb[0].mxu0
        %v325 = vadd.f32 0.0, %v324
        %v326 = vpop.f32.mrb[0].mxu0
        %327 = vmatprep.mubr.f32.mxu0 0.0
        %328 = vmatmul.mubr.f32.gmra.mrb[0].mxu0 %v183
        %v329 = vpop.f32.mrb[0].mxu0
        %v330 = vadd.f32 0.0, %v329
        %v331 = vpop.f32.mrb[0].mxu0
        %332 = vmatprep.mubr.f32.mxu0 0.0
        %333 = vmatmul.mubr.f32.gmra.mrb[0].mxu0 %v184
        %v334 = vpop.f32.mrb[0].mxu0
        %v335 = vadd.f32 0.0, %v334
        %v336 = vpop.f32.mrb[0].mxu0
        %337 = vmatprep.mubr.f32.mxu0 0.0
        %338 = vmatmul.mubr.f32.gmra.mrb[0].mxu0 %v185
        %v339 = vpop.f32.mrb[0].mxu0
        %v340 = vadd.f32 0.0, %v339
        %v341 = vpop.f32.mrb[0].mxu0
        %342 = vmatprep.mubr.f32.mxu0 0.0
        %343 = vmatmul.mubr.f32.gmra.mrb[0].mxu0 %v186
        %v344 = vpop.f32.mrb[0].mxu0
        %v345 = vadd.f32 0.0, %v344
        %v346 = vpop.f32.mrb[0].mxu0
        %347 = vmatprep.mubr.f32.mxu0 0.0
        %348 = vmatmul.mubr.f32.gmra.mrb[0].mxu0 %v187
        %v349 = vpop.f32.mrb[0].mxu0
        %v350 = vadd.f32 0.0, %v349
        %v351 = vpop.f32.mrb[0].mxu0
        %352 = vmatprep.mubr.f32.mxu0 0.0
        %353 = vmatmul.mubr.f32.gmra.mrb[0].mxu0 %v188
        %v354 = vpop.f32.mrb[0].mxu0
        %v355 = vadd.f32 0.0, %v354
        %v356 = vpop.f32.mrb[0].mxu0
        %357 = vmatprep.mubr.f32.mxu0 0.0
        %358 = vmatmul.mubr.f32.gmra.mrb[0].mxu0 %v189
        %v359 = vpop.f32.mrb[0].mxu0
        %v360 = vadd.f32 0.0, %v359
        %v361 = vpop.f32.mrb[0].mxu0
        %362 = vmatprep.mubr.f32.mxu0 0.0
        %363 = vmatmul.mubr.f32.gmra.mrb[0].mxu0 %v190
        %v364 = vpop.f32.mrb[0].mxu0
        %v365 = vadd.f32 0.0, %v364
        %v366 = vpop.f32.mrb[0].mxu0
        %367 = vmatprep.mubr.f32.mxu0 0.0
        %368 = vmatmul.mubr.f32.gmra.mrb[0].mxu0 %v191
        %v369 = vpop.f32.mrb[0].mxu0
        %v370 = vadd.f32 0.0, %v369
        %v371 = vpop.f32.mrb[0].mxu0
        %372 = vmatprep.mubr.f32.mxu0 0.0
        %373 = vmatmul.mubr.f32.gmra.mrb[0].mxu0 %v192
        %v374 = vpop.f32.mrb[0].mxu0
        %v375 = vadd.f32 0.0, %v374
        %v376 = vpop.f32.mrb[0].mxu0
        %377 = vmatprep.mubr.f32.mxu0 0.0
        %378 = vmatmul.mubr.f32.gmra.mrb[0].mxu0 %v193
        %v379 = vpop.f32.mrb[0].mxu0
        %v380 = vadd.f32 0.0, %v379
        %v381 = vpop.f32.mrb[0].mxu0
        %382 = vmatprep.mubr.f32.mxu0 0.0
        %383 = vmatmul.mubr.f32.gmra.mrb[0].mxu0 %v194
        %v384 = vpop.f32.mrb[0].mxu0
        %v385 = vadd.f32 0.0, %v384
        %v386 = vpop.f32.mrb[0].mxu0
        %387 = vmatprep.mubr.f32.mxu0 0.0
        %388 = vmatmul.mubr.f32.gmra.mrb[0].mxu0 %v195
        %v389 = vpop.f32.mrb[0].mxu0
        %v390 = vadd.f32 0.0, %v389
        %v391 = vpop.f32.mrb[0].mxu0
        %392 = vmatprep.mubr.f32.mxu0 0.0
        %393 = vmatmul.mubr.f32.gmra.mrb[0].mxu0 %v196
        %v394 = vpop.f32.mrb[0].mxu0
        %v395 = vadd.f32 0.0, %v394
        %v396 = vpop.f32.mrb[0].mxu0
        %397 = vmatprep.mubr.f32.mxu0 0.0
        %398 = vmatmul.mubr.f32.gmra.mrb[0].mxu0 %v197
        %v399 = vpop.f32.mrb[0].mxu0
        %v400 = vadd.f32 0.0, %v399
        %v401 = vpop.f32.mrb[0].mxu0
        %402 = vmatprep.mubr.f32.mxu0 0.0
        %403 = vmatmul.mubr.f32.gmra.mrb[0].mxu0 %v198
        %v404 = vpop.f32.mrb[0].mxu0
        %v405 = vadd.f32 0.0, %v404
        %v406 = vpop.f32.mrb[0].mxu0
        %407 = vmatprep.mubr.f32.mxu0 0.0
        %408 = vmatmul.mubr.f32.gmra.mrb[0].mxu0 %v199
        %v409 = vpop.f32.mrb[0].mxu0
        %v410 = vadd.f32 0.0, %v409
        %v411 = vpop.f32.mrb[0].mxu0
        %412 = vmatprep.mubr.f32.mxu0 0.0
        %413 = vmatmul.mubr.f32.gmra.mrb[0].mxu0 %v200
        %v414 = vpop.f32.mrb[0].mxu0
        %v415 = vadd.f32 0.0, %v414
        %v416 = vpop.f32.mrb[0].mxu0
        %417 = vmatprep.mubr.f32.mxu0 0.0
        %418 = vmatmul.mubr.f32.gmra.mrb[0].mxu0 %v201
        %v419 = vpop.f32.mrb[0].mxu0
        %v420 = vadd.f32 0.0, %v419
        %v421 = vpop.f32.mrb[0].mxu0
        %422 = vmatprep.mubr.f32.mxu0 0.0
        %423 = vmatmul.mubr.f32.gmra.mrb[0].mxu0 %v202
        %v424 = vpop.f32.mrb[0].mxu0
        %v425 = vadd.f32 0.0, %v424
        %v426 = vpop.f32.mrb[0].mxu0
        %427 = vmatprep.mubr.f32.mxu0 0.0
        %428 = vmatmul.mubr.f32.gmra.mrb[0].mxu0 %v203
        %v429 = vpop.f32.mrb[0].mxu0
        %v430 = vadd.f32 0.0, %v429
        %v431 = vpop.f32.mrb[0].mxu0
        %432 = vmatprep.mubr.f32.mxu0 0.0
        %433 = vmatmul.mubr.f32.gmra.mrb[0].mxu0 %v204
        %v434 = vpop.f32.mrb[0].mxu0
        %v435 = vadd.f32 0.0, %v434
        %v436 = vpop.f32.mrb[0].mxu0
        %437 = vmatprep.mubr.f32.mxu0 0.0
        %438 = vmatmul.mubr.f32.gmra.mrb[0].mxu0 %v205
        %v439 = vpop.f32.mrb[0].mxu0
        %v440 = vadd.f32 0.0, %v439
        %v441 = vpop.f32.mrb[0].mxu0
        %442 = vmatprep.mubr.f32.mxu0 0.0
        %443 = vmatmul.mubr.f32.gmra.mrb[0].mxu0 %v206
        %v444 = vpop.f32.mrb[0].mxu0
        %v445 = vadd.f32 0.0, %v444
        %v446 = vpop.f32.mrb[0].mxu0
        %447 = vmatprep.mubr.f32.mxu0 0.0
        %448 = vmatmul.mubr.f32.gmra.mrb[0].mxu0 %v207
        %v449 = vpop.f32.mrb[0].mxu0
        %v450 = vadd.f32 0.0, %v449
        %v451 = vpop.f32.mrb[0].mxu0
        %452 = vmatprep.mubr.f32.mxu0 0.0
        %453 = vmatmul.mubr.f32.gmra.mrb[0].mxu0 %v208
        %v454 = vpop.f32.mrb[0].mxu0
        %v455 = vadd.f32 0.0, %v454
        %v456 = vpop.f32.mrb[0].mxu0
        %457 = vmatprep.mubr.f32.mxu0 0.0
        %458 = vmatmul.mubr.f32.gmra.mrb[0].mxu0 %v209
        %v459 = vpop.f32.mrb[0].mxu0
        %v460 = vadd.f32 0.0, %v459
        %v461 = vpop.f32.mrb[0].mxu0
        %462 = vmatprep.mubr.f32.mxu0 0.0
        %463 = vmatmul.mubr.f32.gmra.mrb[0].mxu0 %v210
        %v464 = vpop.f32.mrb[0].mxu0
        %v465 = vadd.f32 0.0, %v464
        %v466 = vpop.f32.mrb[0].mxu0
        %467 = vmatprep.mubr.f32.mxu0 0.0
        %468 = vmatmul.mubr.f32.gmra.mrb[0].mxu0 %v211
        %v469 = vpop.f32.mrb[0].mxu0
        %v470 = vadd.f32 0.0, %v469
        %v471 = vpop.f32.mrb[0].mxu0
        %472 = vmatprep.mubr.f32.mxu0 0.0
        %473 = vmatmul.mubr.f32.gmra.mrb[0].mxu0 %v212
        %v474 = vpop.f32.mrb[0].mxu0
        %v475 = vadd.f32 0.0, %v474
        %v476 = vpop.f32.mrb[0].mxu0
        %477 = vmatprep.mubr.f32.mxu0 0.0
        %478 = vmatmul.mubr.f32.gmra.mrb[0].mxu0 %v213
        %v479 = vpop.f32.mrb[0].mxu0
        %v480 = vadd.f32 0.0, %v479
        %v481 = vpop.f32.mrb[0].mxu0
        %482 = vmatprep.mubr.f32.mxu0 0.0
        %483 = vmatmul.mubr.f32.gmra.mrb[0].mxu0 %v214
        %v484 = vpop.f32.mrb[0].mxu0
        %v485 = vadd.f32 0.0, %v484
        %v486 = vpop.f32.mrb[0].mxu0
        %487 = vmatprep.mubr.f32.mxu0 0.0
        %488 = vmatmul.mubr.f32.gmra.mrb[0].mxu0 %v215
        %v489 = vpop.f32.mrb[0].mxu0
        %v490 = vadd.f32 0.0, %v489
        %v491 = vpop.f32.mrb[0].mxu0
        %492 = vmatprep.mubr.f32.mxu0 0.0
        %493 = vmatmul.mubr.f32.gmra.mrb[0].mxu0 %v216
        %v494 = vpop.f32.mrb[0].mxu0
        %v495 = vadd.f32 0.0, %v494
        %v496 = vpop.f32.mrb[0].mxu0
        %497 = vmatprep.mubr.f32.mxu0 0.0
        %498 = vmatmul.mubr.f32.gmra.mrb[0].mxu0 %v217
        %v499 = vpop.f32.mrb[0].mxu0
        %v500 = vadd.f32 0.0, %v499
        %v501 = vpop.f32.mrb[0].mxu0
        %502 = vmatprep.mubr.f32.mxu0 0.0
        %503 = vmatmul.mubr.f32.gmra.mrb[0].mxu0 %v218
        %v504 = vpop.f32.mrb[0].mxu0
        %v505 = vadd.f32 0.0, %v504
        %v506 = vpop.f32.mrb[0].mxu0
        %507 = vmatprep.mubr.f32.mxu0 0.0
        %508 = vmatmul.mubr.f32.gmra.mrb[0].mxu0 %v219
        %v509 = vpop.f32.mrb[0].mxu0
        %v510 = vadd.f32 0.0, %v509
        %v511 = vpop.f32.mrb[0].mxu0
        %512 = vmatprep.mubr.f32.mxu0 0.0
        %513 = vmatmul.mubr.f32.gmra.mrb[0].mxu0 %v220
        %v514 = vpop.f32.mrb[0].mxu0
        %v515 = vadd.f32 0.0, %v514
        %v516 = vpop.f32.mrb[0].mxu0
        %517 = vmatprep.mubr.f32.mxu0 0.0
        %518 = vmatmul.mubr.f32.gmra.mrb[0].mxu0 %v221
        %v519 = vpop.f32.mrb[0].mxu0
        %v520 = vadd.f32 0.0, %v519
        %v521 = vpop.f32.mrb[0].mxu0
        %522 = vmatprep.mubr.f32.mxu0 0.0
        %523 = vmatmul.mubr.f32.gmra.mrb[0].mxu0 %v222
        %v524 = vpop.f32.mrb[0].mxu0
        %v525 = vadd.f32 0.0, %v524
        %v526 = vpop.f32.mrb[0].mxu0
        %527 = vmatprep.mubr.f32.mxu0 0.0
        %528 = vmatmul.mubr.f32.gmra.mrb[0].mxu0 %v223
        %v529 = vpop.f32.mrb[0].mxu0
        %v530 = vadd.f32 0.0, %v529
        %v531 = vpop.f32.mrb[0].mxu0
        %532 = vmatprep.mubr.f32.mxu0 0.0
        %533 = vmatmul.mubr.f32.gmra.mrb[0].mxu0 %v224
        %v534 = vpop.f32.mrb[0].mxu0
        %v535 = vadd.f32 0.0, %v534
        %v536 = vpop.f32.mrb[0].mxu0
        %537 = vmatprep.mubr.f32.mxu0 0.0
        %538 = vmatmul.mubr.f32.gmra.mrb[0].mxu0 %v225
        %v539 = vpop.f32.mrb[0].mxu0
        %v540 = vadd.f32 0.0, %v539
        %v541 = vpop.f32.mrb[0].mxu0
        %542 = vmatprep.mubr.f32.mxu0 0.0
        %543 = vmatmul.mubr.f32.gmra.mrb[0].mxu0 %v226
        %v544 = vpop.f32.mrb[0].mxu0
        %v545 = vadd.f32 0.0, %v544
        %v546 = vpop.f32.mrb[0].mxu0
        %547 = vdwg.mxu0
        %548 = vst [vmem:[%s176] sm:$0xff] %v310
        %549 = vst [vmem:[%s176 + $0x8] sm:$0xff] %v315
        %550 = vst [vmem:[%s176 + $0x10] sm:$0xff] %v320
        %551 = vst [vmem:[%s176 + $0x18] sm:$0xff] %v325
        %552 = vst [vmem:[%s176 + $0x20] sm:$0xff] %v330
        %553 = vst [vmem:[%s176 + $0x28] sm:$0xff] %v335
        %554 = vst [vmem:[%s176 + $0x30] sm:$0xff] %v340
        %555 = vst [vmem:[%s176 + $0x38] sm:$0xff] %v345
        %556 = vst [vmem:[%s176 + $0x40] sm:$0xff] %v350
        %557 = vst [vmem:[%s176 + $0x48] sm:$0xff] %v355
        %558 = vst [vmem:[%s176 + $0x50] sm:$0xff] %v360
        %559 = vst [vmem:[%s176 + $0x58] sm:$0xff] %v365
        %560 = vst [vmem:[%s176 + $0x60] sm:$0xff] %v370
        %561 = vst [vmem:[%s176 + $0x68] sm:$0xff] %v375
        %562 = vst [vmem:[%s176 + $0x70] sm:$0xff] %v380
        %563 = vst [vmem:[%s176 + $0x78] sm:$0xff] %v385
        %564 = vst [vmem:[%s176 + $0x80] sm:$0xff] %v390
        %565 = vst [vmem:[%s176 + $0x88] sm:$0xff] %v395
        %566 = vst [vmem:[%s176 + $0x90] sm:$0xff] %v400
        %567 = vst [vmem:[%s176 + $0x98] sm:$0xff] %v405
        %568 = vst [vmem:[%s176 + $0xa0] sm:$0xff] %v410
        %569 = vst [vmem:[%s176 + $0xa8] sm:$0xff] %v415
        %570 = vst [vmem:[%s176 + $0xb0] sm:$0xff] %v420
        %571 = vst [vmem:[%s176 + $0xb8] sm:$0xff] %v425
        %572 = vst [vmem:[%s176 + $0xc0] sm:$0xff] %v430
        %573 = vst [vmem:[%s176 + $0xc8] sm:$0xff] %v435
        %574 = vst [vmem:[%s176 + $0xd0] sm:$0xff] %v440
        %575 = vst [vmem:[%s176 + $0xd8] sm:$0xff] %v445
        %576 = vst [vmem:[%s176 + $0xe0] sm:$0xff] %v450
        %577 = vst [vmem:[%s176 + $0xe8] sm:$0xff] %v455
        %578 = vst [vmem:[%s176 + $0xf0] sm:$0xff] %v460
        %579 = vst [vmem:[%s176 + $0xf8] sm:$0xff] %v465
        %580 = vst [vmem:[%s176 + $0x100] sm:$0xff] %v470
        %581 = vst [vmem:[%s176 + $0x108] sm:$0xff] %v475
        %582 = vst [vmem:[%s176 + $0x110] sm:$0xff] %v480
        %583 = vst [vmem:[%s176 + $0x118] sm:$0xff] %v485
        %584 = vst [vmem:[%s176 + $0x120] sm:$0xff] %v490
        %585 = vst [vmem:[%s176 + $0x128] sm:$0xff] %v495
        %586 = vst [vmem:[%s176 + $0x130] sm:$0xff] %v500
        %587 = vst [vmem:[%s176 + $0x138] sm:$0xff] %v505
        %588 = vst [vmem:[%s176 + $0x140] sm:$0xff] %v510
        %589 = vst [vmem:[%s176 + $0x148] sm:$0xff] %v515
        %590 = vst [vmem:[%s176 + $0x150] sm:$0xff] %v520
        %591 = vst [vmem:[%s176 + $0x158] sm:$0xff] %v525
        %592 = vst [vmem:[%s176 + $0x160] sm:$0xff] %v530
        %593 = vst [vmem:[%s176 + $0x168] sm:$0xff] %v535
        %594 = vst [vmem:[%s176 + $0x170] sm:$0xff] %v540
        %595 = vst [vmem:[%s176 + $0x178] sm:$0xff] %v545
        %s596 = sand.u32 %s75, 1
        %s597 = scalar_lea.sflag [#allocation4], %s596
        %s598 = sand.u32 %s75, 1
        %s599 = smul.addr %s598, 384
        %s600 = scalar_lea.vmem [#allocation7], %s599
        // Predicated region
        $region37: #{tpu_custom_call.1} parent=27 // pred_check
          %p601 = pneg %p85
        $region38: #{tpu_custom_call.1} parent=27 // pred_check_branch
          %603 = sbr.rel (%p601) target = $region40
        $region39: #{tpu_custom_call.1} parent=27 // pred_region
          %s604 = smul.u32 48, %s20
          %s606 = ssub.s32 6144, 6144
          %607 = vsyncadd %s597, %s606
          %s608 = smul.addr %s604, 128
          %s609 = scalar_lea.hbm %s2, %s608
          %s610 = sshll.u32 %s600, 4
          %s611 = int_to_ptr.vmem [resolvable:$true] %s610
          %616 = dma.vmem_to_hbm [thread:$0]  %s611, 6144, %s609, %s597, 128, 128, 8
        $region40: #{tpu_custom_call.1} parent=27 // pred_fallthru
          _
      $region28: #{tpu_custom_call.1} parent=5 // pred_fallthru
        _
      %p617 = scmp.le.s32.totalorder 2, %s15
      // Predicated region
      $region41: #{tpu_custom_call.1} parent=5 // pred_check
        %p618 = pneg %p617
      $region42: #{tpu_custom_call.1} parent=5 // pred_check_branch
        %620 = sbr.rel (%p618) target = $region44
      $region43: #{tpu_custom_call.1} parent=5 // pred_region
        %s621 = ssub.s32 %s15, 2
        // Predicated region
        $region45: #{tpu_custom_call.1} parent=43 // pred_check
          %p622 = pneg %p91
        $region46: #{tpu_custom_call.1} parent=43 // pred_check_branch
          %624 = sbr.rel (%p622) target = $region48
        $region47: #{tpu_custom_call.1} parent=43 // pred_region
          %s625 = sand.u32 %s76, 1
          %s626 = scalar_lea.sflag [#allocation4], %s625
          %s627 = sand.u32 %s76, 1
          %s628 = smul.addr %s627, 384
          %s629 = scalar_lea.vmem [#allocation7], %s628
          %630 = dma.done %s626, 6144
        $region48: #{tpu_custom_call.1} parent=43 // pred_fallthru
          _
      $region44: #{tpu_custom_call.1} parent=5 // pred_fallthru
        _
    $region6: #{tpu_custom_call.1} parent=1 // loop_footer
      %s19 = sadd.s32 1, %s15
    $region7: #{tpu_custom_call.1} parent=1 // loop_footer_branch
      %14 = sbr.rel target = $region3
    $region8: #{tpu_custom_call.1} parent=1 // loop_exit
      _
    %631 = vsyncpa [#allocation3], 1
    %s632 = scalar_lea.sflag [#allocation3], 1
    %633 = vsyncpa %s632, 1
    %634 = vsyncpa [#allocation6], 1
    %635 = vsyncpa [#allocation4], 1
    %s636 = scalar_lea.sflag [#allocation4], 1
    %637 = vsyncpa %s636, 1

</llo_original>
